<compile_context>
chip_gen: v7x
topology: tpu7x:2x2x1
jax: 0.10.0
libtpu: 0.0.40
codegen_flags: <defaults>
</compile_context>

<pallas_src>
import jax
import jax.numpy as jnp
from jax import lax
from jax.experimental import pallas as pl
from jax.experimental.pallas import tpu as pltpu

N, CIN, H, W = 2, 3, 16, 16        # small RGB batch, consistent with the module
C1, C2 = 32, 16                    # mobilenet_v2 stem / first bottleneck widths
HO, WO = H // 2, W // 2            # 8, 8   (k=3, s=2, p=1)
WOC = WO * C1                      # 256: lane-dense (x fused with C) axis
KP = 32                            # per-xo im2col depth: 27 real taps + 1 bias slot + pad
NTAPS = 9 * CIN                    # 27
BIAS_SLOT = NTAPS                  # 27: constant-1 slot that carries the folded BN bias
STEM_ROWS = WO * KP                # 256 rows of the block-diagonal stem weight
B1_ROW = STEM_ROWS + 16            # 272: depthwise-bias row (8-aligned) in the weight slab
WSLAB_ROWS = STEM_ROWS + 24        # 280 rows total (sublane-aligned)
EPS = 1e-5


def _mbv2_block_kernel(pm_ref, wslab_ref, wpwb_ref, out_ref):
    # ---- features[0]: 3x3 stride-2 conv (3->32) + BN + ReLU6 -------------------------
    # Block-diagonal im2col matmul emits the lane-dense layout (lanes = xo*C1 + c)
    # directly; the BN scale AND bias are folded into the weight (bias via the ones slot).
    h0 = jnp.dot(pm_ref[...], wslab_ref[0:STEM_ROWS, :],
                 preferred_element_type=jnp.float32)                # (16, 256)
    h0 = jnp.clip(h0, 0.0, 6.0)                                     # ReLU6
    h0 = h0.reshape(N, HO, WOC)                                     # sublane-only split

    # zero rows above/below each image (value-level; no VMEM scratch roundtrip)
    zrow = jnp.zeros((N, 1, WOC), jnp.float32)
    hp = jnp.concatenate([zrow, h0, zrow], axis=1)                  # (2, 10, 256)

    # horizontal neighbours via lane rotation (XLU slot); invalid wrapped lanes are
    # already zeroed in the tiled depthwise weights, so no masks are needed here.
    hp2 = hp.reshape(N * (HO + 2), WOC)
    hp_l = pltpu.roll(hp2, shift=C1, axis=1).reshape(N, HO + 2, WOC)        # reads x-1
    hp_r = pltpu.roll(hp2, shift=WOC - C1, axis=1).reshape(N, HO + 2, WOC)  # reads x+1

    # ---- features[1].conv[0]: depthwise 3x3 + BN + ReLU6 ------------------------------
    wdw = wslab_ref[STEM_ROWS:STEM_ROWS + 9, :]                     # (9, 256) single load
    b1 = wslab_ref[B1_ROW:B1_ROW + 1, :]                            # (1, 256)
    taps = (hp_l, hp, hp_r)                                         # kx = 0, 1, 2
    acc = None
    for ky in range(3):
        for kx in range(3):
            term = taps[kx][:, ky:ky + HO, :] * wdw[ky * 3 + kx]
            acc = term if acc is None else acc + term
    h1 = jnp.clip(acc + b1, 0.0, 6.0)                               # (2, 8, 256)

    # ---- spatial mean commuted through the affine pointwise conv ----------------------
    # Sum over H here; the sum over W, the 1/(H*W) factor and the BN scale are folded
    # into the tiled pointwise weight; the BN shift is the last slab row.
    hs = jnp.sum(h1, axis=1)                                        # (2, 256)
    out_ref[...] = (jnp.dot(hs, wpwb_ref[0:WOC, :],
                            preferred_element_type=jnp.float32)
                    + wpwb_ref[WOC:WOC + 1, :])                     # (2, 16)


def _forward(x_nchw, params):
    x = jnp.transpose(x_nchw, (0, 2, 3, 1)).astype(jnp.float32)     # NCHW -> NHWC
    xp = jnp.pad(x, ((0, 0), (1, 1), (1, 1), (0, 0)))               # (N, 18, 18, 3)

    # im2col for the stride-2 stem conv, laid out (N*HO, WO*KP) so the block-diagonal
    # matmul produces the lane-dense depthwise layout with zero relayout.  Slot 27 of
    # every patch is a constant 1 that carries the folded BN bias.
    taps = [xp[:, ky:ky + 2 * HO:2, kx:kx + 2 * WO:2, :]
            for ky in range(3) for kx in range(3)]                  # 9 x (N, 8, 8, 3)
    patch = jnp.concatenate(
        taps + [jnp.ones((N, HO, WO, 1), jnp.float32),
                jnp.zeros((N, HO, WO, KP - NTAPS - 1), jnp.float32)],
        axis=-1)                                                    # (N, 8, 8, 32)
    pm = patch.reshape(N * HO, WO * KP)                             # (16, 256)

    return pl.pallas_call(
        _mbv2_block_kernel,
        out_shape=jax.ShapeDtypeStruct((N, C2), jnp.float32),
        in_specs=[pl.BlockSpec(memory_space=pltpu.MemorySpace.VMEM)] * 3,
        out_specs=pl.BlockSpec(memory_space=pltpu.MemorySpace.VMEM),
        cost_estimate=pl.CostEstimate(flops=2_400_000, transcendentals=0,
                                      bytes_accessed=350_000),
    )(pm, params['wslab'], params['wpwb'])


# Single executable for the whole forward: prologue fuses, kernel launches once.
flatten_mobilenet_v2_forward = jax.jit(_forward)


def _fold_bn(gamma, beta, mean, var):
    s = gamma / jnp.sqrt(var + EPS)
    return s, beta - mean * s


def make_params(key):
    ks = jax.random.split(key, 6)
    w0 = 0.2 * jax.random.normal(ks[0], (3, 3, CIN, C1), jnp.float32)   # HWIO
    wdw = 0.2 * jax.random.normal(ks[1], (3, 3, C1), jnp.float32)       # HW C
    wpw = 0.2 * jax.random.normal(ks[2], (C1, C2), jnp.float32)         # Cin Cout

    def bn(k, c):
        k1, k2, k3, k4 = jax.random.split(k, 4)
        gamma = 1.0 + 0.1 * jax.random.normal(k1, (c,), jnp.float32)
        beta = 0.1 * jax.random.normal(k2, (c,), jnp.float32)
        mean = 0.1 * jax.random.normal(k3, (c,), jnp.float32)
        var = 0.5 + jax.random.uniform(k4, (c,), jnp.float32)
        return _fold_bn(gamma, beta, mean, var)

    s0, b0 = bn(ks[3], C1)
    s1, b1 = bn(ks[4], C1)
    s2, b2 = bn(ks[5], C2)

    # ---- stem: per-xo im2col weight (BN scale folded, bias in the ones-slot row) ------
    w0m = w0.reshape(NTAPS, C1) * s0[None, :]                        # (27, 32)
    w0k = (jnp.zeros((KP, C1), jnp.float32)
           .at[:NTAPS].set(w0m)
           .at[BIAS_SLOT].set(b0))                                   # (32, 32)
    w_bd = jnp.kron(jnp.eye(WO, dtype=jnp.float32), w0k)             # (256, 256) block-diag

    # ---- depthwise: scale folded, tiled over x, zero-pad border folded into weights ---
    wdwf = wdw * s1[None, None, :]
    wdw_t = jnp.tile(wdwf[:, :, None, :], (1, 1, WO, 1)).reshape(3, 3, WOC)
    wdw_t = wdw_t.at[:, 0, :C1].set(0.0)             # kx=0 reads x-1: invalid at x=0
    wdw_t = wdw_t.at[:, 2, (WO - 1) * C1:].set(0.0)  # kx=2 reads x+1: invalid at x=WO-1
    wdw9 = wdw_t.reshape(9, WOC)                                     # rows ordered ky*3+kx
    b1_t = jnp.tile(b1, WO)                                          # (256,)

    # ---- fused weight slab: [stem block-diag | depthwise taps | depthwise bias] -------
    wslab = (jnp.zeros((WSLAB_ROWS, WOC), jnp.float32)
             .at[:STEM_ROWS].set(w_bd)
             .at[STEM_ROWS:STEM_ROWS + 9].set(wdw9)
             .at[B1_ROW].set(b1_t))

    # ---- pointwise: BN scale + 1/(H*W) mean folded; last row = output bias ------------
    wpwf = (wpw * s2[None, :]) / float(HO * WO)
    wpw_t = jnp.tile(wpwf, (WO, 1))                                  # (256, 16)
    wpwb = jnp.concatenate([wpw_t, b2.reshape(1, C2)], axis=0)       # (257, 16)

    params = dict(wslab=wslab, wpwb=wpwb)
    ref = dict(  # OIHW layouts + unfolded BN for the plain-JAX reference check
        w0=jnp.transpose(w0, (3, 2, 0, 1)),
        wdw=jnp.transpose(wdw, (2, 0, 1))[:, None, :, :],
        wpw=jnp.transpose(wpw, (1, 0))[:, :, None, None],
        s0=s0, b0=b0, s1=s1, b1=b1, s2=s2, b2=b2,
    )
    return params, ref


def ref_forward(x_nchw, r):
    def bn(y, s, b):
        return y * s[None, :, None, None] + b[None, :, None, None]
    dn = ('NCHW', 'OIHW', 'NCHW')
    hi = lax.Precision.HIGHEST
    y = lax.conv_general_dilated(x_nchw, r['w0'], (2, 2), ((1, 1), (1, 1)),
                                 dimension_numbers=dn, precision=hi)
    y = jnp.clip(bn(y, r['s0'], r['b0']), 0.0, 6.0)
    y = lax.conv_general_dilated(y, r['wdw'], (1, 1), ((1, 1), (1, 1)),
                                 dimension_numbers=dn, feature_group_count=C1,
                                 precision=hi)
    y = jnp.clip(bn(y, r['s1'], r['b1']), 0.0, 6.0)
    y = lax.conv_general_dilated(y, r['wpw'], (1, 1), ((0, 0), (0, 0)),
                                 dimension_numbers=dn, precision=hi)
    y = bn(y, r['s2'], r['b2'])
    return y.mean(axis=(2, 3))


if __name__ == "__main__":
    key = jax.random.PRNGKey(0)
    kx_, kp_ = jax.random.split(key)
    x = jax.random.normal(kx_, (N, CIN, H, W), jnp.float32)   # PyTorch-style NCHW input
    params, ref_params = make_params(kp_)

    out = jax.block_until_ready(flatten_mobilenet_v2_forward(x, params))
    expected = jax.block_until_ready(ref_forward(x, ref_params))

    assert out.shape == (N, C2), out.shape
    max_err = float(jnp.max(jnp.abs(out - expected)))
    assert max_err < 2e-2, f"max abs err {max_err}"
    print("KERNEL_OK")
</pallas_src>

<mosaic_0001>
module attributes {stable_mosaic.version = 11 : i64} {
  func.func @_mbv2_block_kernel(%arg0: memref<16x256xf32, #tpu.memory_space<vmem>>, %arg1: memref<280x256xf32, #tpu.memory_space<vmem>>, %arg2: memref<257x16xf32, #tpu.memory_space<vmem>>, %arg3: memref<2x16xf32, #tpu.memory_space<vmem>>) attributes {dimension_semantics = [], scalar_prefetch = 0 : i64, scratch_operands = 0 : i64, tpu.core_type = #tpu.core_type<tc>} {
    %c0 = arith.constant 0 : index
    %c0_0 = arith.constant 0 : index
    %0 = vector.load %arg0[%c0, %c0_0] : memref<16x256xf32, #tpu.memory_space<vmem>>, vector<16x256xf32>
    %c0_1 = arith.constant 0 : index
    %c0_2 = arith.constant 0 : index
    %1 = vector.load %arg1[%c0_1, %c0_2] : memref<280x256xf32, #tpu.memory_space<vmem>>, vector<256x256xf32>
    %cst = arith.constant dense<0.000000e+00> : vector<16x256xf32>
    %2 = tpu.matmul %0, %1, %cst {dimension_numbers = #tpu.dot_dimension_numbers<[1], [0], [0], [1], [0, 0, 1, 1], [], []>} : vector<16x256xf32>, vector<256x256xf32>, vector<16x256xf32> -> vector<16x256xf32>
    %cst_3 = arith.constant 0.000000e+00 : f32
    %cst_4 = arith.constant 6.000000e+00 : f32
    %3 = vector.broadcast %cst_3 : f32 to vector<16x256xf32>
    %4 = arith.maximumf %3, %2 : vector<16x256xf32>
    %5 = vector.broadcast %cst_4 : f32 to vector<16x256xf32>
    %6 = arith.minimumf %5, %4 : vector<16x256xf32>
    %7 = vector.shape_cast %6 : vector<16x256xf32> to vector<2x8x256xf32>
    %cst_5 = arith.constant 0.000000e+00 : f32
    %8 = vector.broadcast %cst_5 : f32 to vector<2x1x256xf32>
    %9 = tpu.concatenate %8, %7, %8 in 1 : vector<2x1x256xf32>, vector<2x8x256xf32>, vector<2x1x256xf32> -> vector<2x10x256xf32>
    %10 = vector.shape_cast %9 : vector<2x10x256xf32> to vector<20x256xf32>
    %c32_i32 = arith.constant 32 : i32
    %11 = tpu.dynamic_rotate %10 by %c32_i32 dim 1 : vector<20x256xf32>, i32 -> vector<20x256xf32>
    %12 = vector.shape_cast %11 : vector<20x256xf32> to vector<2x10x256xf32>
    %c224_i32 = arith.constant 224 : i32
    %13 = tpu.dynamic_rotate %10 by %c224_i32 dim 1 : vector<20x256xf32>, i32 -> vector<20x256xf32>
    %14 = vector.shape_cast %13 : vector<20x256xf32> to vector<2x10x256xf32>
    %c256 = arith.constant 256 : index
    %c0_6 = arith.constant 0 : index
    %15 = vector.load %arg1[%c256, %c0_6] : memref<280x256xf32, #tpu.memory_space<vmem>>, vector<9x256xf32>
    %c272 = arith.constant 272 : index
    %c0_7 = arith.constant 0 : index
    %16 = vector.load %arg1[%c272, %c0_7] : memref<280x256xf32, #tpu.memory_space<vmem>>, vector<1x256xf32>
    %17 = vector.extract_strided_slice %12 {offsets = [0, 0, 0], sizes = [2, 8, 256], strides = [1, 1, 1]} : vector<2x10x256xf32> to vector<2x8x256xf32>
    %18 = vector.extract_strided_slice %15 {offsets = [0, 0], sizes = [1, 256], strides = [1, 1]} : vector<9x256xf32> to vector<1x256xf32>
    %19 = vector.shape_cast %18 : vector<1x256xf32> to vector<256xf32>
    %20 = vector.shape_cast %19 : vector<256xf32> to vector<1x1x256xf32>
    %21 = vector.broadcast %20 : vector<1x1x256xf32> to vector<2x8x256xf32>
    %22 = arith.mulf %17, %21 : vector<2x8x256xf32>
    %23 = vector.extract_strided_slice %9 {offsets = [0, 0, 0], sizes = [2, 8, 256], strides = [1, 1, 1]} : vector<2x10x256xf32> to vector<2x8x256xf32>
    %24 = vector.extract_strided_slice %15 {offsets = [1, 0], sizes = [1, 256], strides = [1, 1]} : vector<9x256xf32> to vector<1x256xf32>
    %25 = vector.shape_cast %24 : vector<1x256xf32> to vector<256xf32>
    %26 = vector.shape_cast %25 : vector<256xf32> to vector<1x1x256xf32>
    %27 = vector.broadcast %26 : vector<1x1x256xf32> to vector<2x8x256xf32>
    %28 = arith.mulf %23, %27 : vector<2x8x256xf32>
    %29 = arith.addf %22, %28 : vector<2x8x256xf32>
    %30 = vector.extract_strided_slice %14 {offsets = [0, 0, 0], sizes = [2, 8, 256], strides = [1, 1, 1]} : vector<2x10x256xf32> to vector<2x8x256xf32>
    %31 = vector.extract_strided_slice %15 {offsets = [2, 0], sizes = [1, 256], strides = [1, 1]} : vector<9x256xf32> to vector<1x256xf32>
    %32 = vector.shape_cast %31 : vector<1x256xf32> to vector<256xf32>
    %33 = vector.shape_cast %32 : vector<256xf32> to vector<1x1x256xf32>
    %34 = vector.broadcast %33 : vector<1x1x256xf32> to vector<2x8x256xf32>
    %35 = arith.mulf %30, %34 : vector<2x8x256xf32>
    %36 = arith.addf %29, %35 : vector<2x8x256xf32>
    %37 = vector.extract_strided_slice %12 {offsets = [0, 1, 0], sizes = [2, 8, 256], strides = [1, 1, 1]} : vector<2x10x256xf32> to vector<2x8x256xf32>
    %38 = vector.extract_strided_slice %15 {offsets = [3, 0], sizes = [1, 256], strides = [1, 1]} : vector<9x256xf32> to vector<1x256xf32>
    %39 = vector.shape_cast %38 : vector<1x256xf32> to vector<256xf32>
    %40 = vector.shape_cast %39 : vector<256xf32> to vector<1x1x256xf32>
    %41 = vector.broadcast %40 : vector<1x1x256xf32> to vector<2x8x256xf32>
    %42 = arith.mulf %37, %41 : vector<2x8x256xf32>
    %43 = arith.addf %36, %42 : vector<2x8x256xf32>
    %44 = vector.extract_strided_slice %9 {offsets = [0, 1, 0], sizes = [2, 8, 256], strides = [1, 1, 1]} : vector<2x10x256xf32> to vector<2x8x256xf32>
    %45 = vector.extract_strided_slice %15 {offsets = [4, 0], sizes = [1, 256], strides = [1, 1]} : vector<9x256xf32> to vector<1x256xf32>
    %46 = vector.shape_cast %45 : vector<1x256xf32> to vector<256xf32>
    %47 = vector.shape_cast %46 : vector<256xf32> to vector<1x1x256xf32>
    %48 = vector.broadcast %47 : vector<1x1x256xf32> to vector<2x8x256xf32>
    %49 = arith.mulf %44, %48 : vector<2x8x256xf32>
    %50 = arith.addf %43, %49 : vector<2x8x256xf32>
    %51 = vector.extract_strided_slice %14 {offsets = [0, 1, 0], sizes = [2, 8, 256], strides = [1, 1, 1]} : vector<2x10x256xf32> to vector<2x8x256xf32>
    %52 = vector.extract_strided_slice %15 {offsets = [5, 0], sizes = [1, 256], strides = [1, 1]} : vector<9x256xf32> to vector<1x256xf32>
    %53 = vector.shape_cast %52 : vector<1x256xf32> to vector<256xf32>
    %54 = vector.shape_cast %53 : vector<256xf32> to vector<1x1x256xf32>
    %55 = vector.broadcast %54 : vector<1x1x256xf32> to vector<2x8x256xf32>
    %56 = arith.mulf %51, %55 : vector<2x8x256xf32>
    %57 = arith.addf %50, %56 : vector<2x8x256xf32>
    %58 = vector.extract_strided_slice %12 {offsets = [0, 2, 0], sizes = [2, 8, 256], strides = [1, 1, 1]} : vector<2x10x256xf32> to vector<2x8x256xf32>
    %59 = vector.extract_strided_slice %15 {offsets = [6, 0], sizes = [1, 256], strides = [1, 1]} : vector<9x256xf32> to vector<1x256xf32>
    %60 = vector.shape_cast %59 : vector<1x256xf32> to vector<256xf32>
    %61 = vector.shape_cast %60 : vector<256xf32> to vector<1x1x256xf32>
    %62 = vector.broadcast %61 : vector<1x1x256xf32> to vector<2x8x256xf32>
    %63 = arith.mulf %58, %62 : vector<2x8x256xf32>
    %64 = arith.addf %57, %63 : vector<2x8x256xf32>
    %65 = vector.extract_strided_slice %9 {offsets = [0, 2, 0], sizes = [2, 8, 256], strides = [1, 1, 1]} : vector<2x10x256xf32> to vector<2x8x256xf32>
    %66 = vector.extract_strided_slice %15 {offsets = [7, 0], sizes = [1, 256], strides = [1, 1]} : vector<9x256xf32> to vector<1x256xf32>
    %67 = vector.shape_cast %66 : vector<1x256xf32> to vector<256xf32>
    %68 = vector.shape_cast %67 : vector<256xf32> to vector<1x1x256xf32>
    %69 = vector.broadcast %68 : vector<1x1x256xf32> to vector<2x8x256xf32>
    %70 = arith.mulf %65, %69 : vector<2x8x256xf32>
    %71 = arith.addf %64, %70 : vector<2x8x256xf32>
    %72 = vector.extract_strided_slice %14 {offsets = [0, 2, 0], sizes = [2, 8, 256], strides = [1, 1, 1]} : vector<2x10x256xf32> to vector<2x8x256xf32>
    %73 = vector.extract_strided_slice %15 {offsets = [8, 0], sizes = [1, 256], strides = [1, 1]} : vector<9x256xf32> to vector<1x256xf32>
    %74 = vector.shape_cast %73 : vector<1x256xf32> to vector<256xf32>
    %75 = vector.shape_cast %74 : vector<256xf32> to vector<1x1x256xf32>
    %76 = vector.broadcast %75 : vector<1x1x256xf32> to vector<2x8x256xf32>
    %77 = arith.mulf %72, %76 : vector<2x8x256xf32>
    %78 = arith.addf %71, %77 : vector<2x8x256xf32>
    %79 = vector.shape_cast %16 : vector<1x256xf32> to vector<1x1x256xf32>
    %80 = vector.broadcast %79 : vector<1x1x256xf32> to vector<2x8x256xf32>
    %81 = arith.addf %78, %80 : vector<2x8x256xf32>
    %cst_8 = arith.constant 0.000000e+00 : f32
    %cst_9 = arith.constant 6.000000e+00 : f32
    %82 = vector.broadcast %cst_8 : f32 to vector<2x8x256xf32>
    %83 = arith.maximumf %82, %81 : vector<2x8x256xf32>
    %84 = vector.broadcast %cst_9 : f32 to vector<2x8x256xf32>
    %85 = arith.minimumf %84, %83 : vector<2x8x256xf32>
    %cst_10 = arith.constant dense<0.000000e+00> : vector<2x256xf32>
    %86 = vector.multi_reduction <add>, %85, %cst_10 [1] : vector<2x8x256xf32> to vector<2x256xf32>
    %c0_11 = arith.constant 0 : index
    %c0_12 = arith.constant 0 : index
    %87 = vector.load %arg2[%c0_11, %c0_12] : memref<257x16xf32, #tpu.memory_space<vmem>>, vector<256x16xf32>
    %cst_13 = arith.constant dense<0.000000e+00> : vector<2x16xf32>
    %88 = tpu.matmul %86, %87, %cst_13 {dimension_numbers = #tpu.dot_dimension_numbers<[1], [0], [0], [1], [0, 0, 1, 1], [], []>} : vector<2x256xf32>, vector<256x16xf32>, vector<2x16xf32> -> vector<2x16xf32>
    %c256_14 = arith.constant 256 : index
    %c0_15 = arith.constant 0 : index
    %89 = vector.load %arg2[%c256_14, %c0_15] : memref<257x16xf32, #tpu.memory_space<vmem>>, vector<1x16xf32>
    %90 = vector.broadcast %89 : vector<1x16xf32> to vector<2x16xf32>
    %91 = arith.addf %88, %90 : vector<2x16xf32>
    %c0_16 = arith.constant 0 : index
    %c0_17 = arith.constant 0 : index
    %92 = vector.load %arg3[%c0_16, %c0_17] : memref<2x16xf32, #tpu.memory_space<vmem>>, vector<2x16xf32>
    tpu.vector_store %arg3[%c0_16, %c0_17], %91 {strides = array<i32>} : memref<2x16xf32, #tpu.memory_space<vmem>>, vector<2x16xf32>,
    return
  }
}

</mosaic_0001>

<llo_original>
// kernel: _forward.1
$region0: #{_forward.1}
  #allocation0 [shape = 'u32[]', space=smem, size = 0x4, offset = 0x4, fixed_abs, tag = 'smem constant byte address 0x4 - core index']
  #allocation1 [shape = 'u32[144,128]{1,0:T(1,128)}', space=vmem, size = 0x12000, scoped, tag = 'internal scratch']
  %s0 = inlined_call_operand.vmem [shape: f32[16,256], index: 0, kind: input, shape index: {}]
  %s1 = inlined_call_operand.vmem [shape: f32[280,256], index: 1, kind: input, shape index: {}]
  %s2 = inlined_call_operand.vmem [shape: f32[257,16], index: 2, kind: input, shape index: {}]
  %s3 = inlined_call_operand.hbm [shape: f32[2,16], index: 3, kind: output, shape index: {}]
  %s4 = sld [smem:[#allocation0]]
  $region22: #{_forward.1} parent=0
    _
  %s6 = ssub.s32 1, %s4
  %s7 = scalar_select 0, %s6, %s4
  $region1: #{_forward.1} parent=0
    #allocation2 [shape = 'u8[1024]{0}', space=vmem, size = 0x400, scoped, tag = 'output window, operand 0, single buffered']
    #allocation3 [shape = 's32[1]{0}', space=sflag, size = 0x4, scoped, tag = 'scoped memory for _forward.1']
    %8 = vsyncpa [#allocation3], 0
    // Predicated region
    $region2: #{_forward.1} parent=1 // pred_check
      _
    $region3: #{_forward.1} parent=1 // pred_check_branch
      %10 = sbr.rel (0) target = $region5
    $region4: #{_forward.1} parent=1 // pred_region
      _
    $region5: #{_forward.1} parent=1 // pred_fallthru
      _
    // Predicated region
    $region6: #{_forward.1} parent=1 // pred_check
      _
    $region7: #{_forward.1} parent=1 // pred_check_branch
      %12 = sbr.rel (0) target = $region9
    $region8: #{_forward.1} parent=1 // pred_region
      _
    $region9: #{_forward.1} parent=1 // pred_fallthru
      _
    // Predicated region
    $region10: #{_forward.1} parent=1 // pred_check
      _
    $region11: #{_forward.1} parent=1 // pred_check_branch
      %14 = sbr.rel (0) target = $region13
    $region12: #{_forward.1} parent=1 // pred_region
      _
    $region13: #{_forward.1} parent=1 // pred_fallthru
      _
    %v15 = vld [vmem:[%s0] sm:$0xff]
    %v16 = vld [vmem:[%s0 + $0x8] sm:$0xff]
    %v17 = vld [vmem:[%s0 + $0x10] sm:$0xff]
    %v18 = vld [vmem:[%s0 + $0x18] sm:$0xff]
    %v19 = vld [vmem:[%s1] sm:$0xff]
    %v20 = vld [vmem:[%s1 + $0x8] sm:$0xff]
    %v21 = vld [vmem:[%s1 + $0x10] sm:$0xff]
    %v22 = vld [vmem:[%s1 + $0x18] sm:$0xff]
    %v23 = vld [vmem:[%s1 + $0x20] sm:$0xff]
    %v24 = vld [vmem:[%s1 + $0x28] sm:$0xff]
    %v25 = vld [vmem:[%s1 + $0x30] sm:$0xff]
    %v26 = vld [vmem:[%s1 + $0x38] sm:$0xff]
    %v27 = vld [vmem:[%s1 + $0x40] sm:$0xff]
    %v28 = vld [vmem:[%s1 + $0x48] sm:$0xff]
    %v29 = vld [vmem:[%s1 + $0x50] sm:$0xff]
    %v30 = vld [vmem:[%s1 + $0x58] sm:$0xff]
    %v31 = vld [vmem:[%s1 + $0x60] sm:$0xff]
    %v32 = vld [vmem:[%s1 + $0x68] sm:$0xff]
    %v33 = vld [vmem:[%s1 + $0x70] sm:$0xff]
    %v34 = vld [vmem:[%s1 + $0x78] sm:$0xff]
    %v35 = vld [vmem:[%s1 + $0x80] sm:$0xff]
    %v36 = vld [vmem:[%s1 + $0x88] sm:$0xff]
    %v37 = vld [vmem:[%s1 + $0x90] sm:$0xff]
    %v38 = vld [vmem:[%s1 + $0x98] sm:$0xff]
    %v39 = vld [vmem:[%s1 + $0xa0] sm:$0xff]
    %v40 = vld [vmem:[%s1 + $0xa8] sm:$0xff]
    %v41 = vld [vmem:[%s1 + $0xb0] sm:$0xff]
    %v42 = vld [vmem:[%s1 + $0xb8] sm:$0xff]
    %v43 = vld [vmem:[%s1 + $0xc0] sm:$0xff]
    %v44 = vld [vmem:[%s1 + $0xc8] sm:$0xff]
    %v45 = vld [vmem:[%s1 + $0xd0] sm:$0xff]
    %v46 = vld [vmem:[%s1 + $0xd8] sm:$0xff]
    %v47 = vld [vmem:[%s1 + $0xe0] sm:$0xff]
    %v48 = vld [vmem:[%s1 + $0xe8] sm:$0xff]
    %v49 = vld [vmem:[%s1 + $0xf0] sm:$0xff]
    %v50 = vld [vmem:[%s1 + $0xf8] sm:$0xff]
    %v51 = vld [vmem:[%s1 + $0x100] sm:$0xff]
    %v52 = vld [vmem:[%s1 + $0x108] sm:$0xff]
    %v53 = vld [vmem:[%s1 + $0x110] sm:$0xff]
    %v54 = vld [vmem:[%s1 + $0x118] sm:$0xff]
    %v55 = vld [vmem:[%s1 + $0x120] sm:$0xff]
    %v56 = vld [vmem:[%s1 + $0x128] sm:$0xff]
    %v57 = vld [vmem:[%s1 + $0x130] sm:$0xff]
    %v58 = vld [vmem:[%s1 + $0x138] sm:$0xff]
    %v59 = vld [vmem:[%s1 + $0x140] sm:$0xff]
    %v60 = vld [vmem:[%s1 + $0x148] sm:$0xff]
    %v61 = vld [vmem:[%s1 + $0x150] sm:$0xff]
    %v62 = vld [vmem:[%s1 + $0x158] sm:$0xff]
    %v63 = vld [vmem:[%s1 + $0x160] sm:$0xff]
    %v64 = vld [vmem:[%s1 + $0x168] sm:$0xff]
    %v65 = vld [vmem:[%s1 + $0x170] sm:$0xff]
    %v66 = vld [vmem:[%s1 + $0x178] sm:$0xff]
    %v67 = vld [vmem:[%s1 + $0x180] sm:$0xff]
    %v68 = vld [vmem:[%s1 + $0x188] sm:$0xff]
    %v69 = vld [vmem:[%s1 + $0x190] sm:$0xff]
    %v70 = vld [vmem:[%s1 + $0x198] sm:$0xff]
    %v71 = vld [vmem:[%s1 + $0x1a0] sm:$0xff]
    %v72 = vld [vmem:[%s1 + $0x1a8] sm:$0xff]
    %v73 = vld [vmem:[%s1 + $0x1b0] sm:$0xff]
    %v74 = vld [vmem:[%s1 + $0x1b8] sm:$0xff]
    %v75 = vld [vmem:[%s1 + $0x1c0] sm:$0xff]
    %v76 = vld [vmem:[%s1 + $0x1c8] sm:$0xff]
    %v77 = vld [vmem:[%s1 + $0x1d0] sm:$0xff]
    %v78 = vld [vmem:[%s1 + $0x1d8] sm:$0xff]
    %v79 = vld [vmem:[%s1 + $0x1e0] sm:$0xff]
    %v80 = vld [vmem:[%s1 + $0x1e8] sm:$0xff]
    %v81 = vld [vmem:[%s1 + $0x1f0] sm:$0xff]
    %v82 = vld [vmem:[%s1 + $0x1f8] sm:$0xff]
    %83 = vmatprep.subr.mxu0 %v20
    %84 = vmatpush1.msra.mxu0 %v19
    %85 = vmatprep.subr.mxu0 %v22
    %86 = vmatpush1.msra.mxu0 %v21
    %87 = vmatprep.subr.mxu0 %v24
    %88 = vmatpush1.msra.mxu0 %v23
    %89 = vmatprep.subr.mxu0 %v26
    %90 = vmatpush1.msra.mxu0 %v25
    %91 = vmatprep.subr.mxu0 %v28
    %92 = vmatpush1.msra.mxu0 %v27
    %93 = vmatprep.subr.mxu0 %v30
    %94 = vmatpush1.msra.mxu0 %v29
    %95 = vmatprep.subr.mxu0 %v32
    %96 = vmatpush1.msra.mxu0 %v31
    %97 = vmatprep.subr.mxu0 %v34
    %98 = vmatpush1.msra.mxu0 %v33
    %99 = vmatprep.subr.mxu0 %v36
    %100 = vmatpush1.msra.mxu0 %v35
    %101 = vmatprep.subr.mxu0 %v38
    %102 = vmatpush1.msra.mxu0 %v37
    %103 = vmatprep.subr.mxu0 %v40
    %104 = vmatpush1.msra.mxu0 %v39
    %105 = vmatprep.subr.mxu0 %v42
    %106 = vmatpush1.msra.mxu0 %v41
    %107 = vmatprep.subr.mxu0 %v44
    %108 = vmatpush1.msra.mxu0 %v43
    %109 = vmatprep.subr.mxu0 %v46
    %110 = vmatpush1.msra.mxu0 %v45
    %111 = vmatprep.subr.mxu0 %v48
    %112 = vmatpush1.msra.mxu0 %v47
    %113 = vmatprep.subr.mxu0 %v50
    %114 = vmatpush1.msra.mxu0 %v49
    %115 = vmatprep.subr.mxu0 %v52
    %116 = vmatpush1.msra.mxu0 %v51
    %117 = vmatprep.subr.mxu0 %v54
    %118 = vmatpush1.msra.mxu0 %v53
    %119 = vmatprep.subr.mxu0 %v56
    %120 = vmatpush1.msra.mxu0 %v55
    %121 = vmatprep.subr.mxu0 %v58
    %122 = vmatpush1.msra.mxu0 %v57
    %123 = vmatprep.subr.mxu0 %v60
    %124 = vmatpush1.msra.mxu0 %v59
    %125 = vmatprep.subr.mxu0 %v62
    %126 = vmatpush1.msra.mxu0 %v61
    %127 = vmatprep.subr.mxu0 %v64
    %128 = vmatpush1.msra.mxu0 %v63
    %129 = vmatprep.subr.mxu0 %v66
    %130 = vmatpush1.msra.mxu0 %v65
    %131 = vmatprep.subr.mxu0 %v68
    %132 = vmatpush1.msra.mxu0 %v67
    %133 = vmatprep.subr.mxu0 %v70
    %134 = vmatpush1.msra.mxu0 %v69
    %135 = vmatprep.subr.mxu0 %v72
    %136 = vmatpush1.msra.mxu0 %v71
    %137 = vmatprep.subr.mxu0 %v74
    %138 = vmatpush1.msra.mxu0 %v73
    %139 = vmatprep.subr.mxu0 %v76
    %140 = vmatpush1.msra.mxu0 %v75
    %141 = vmatprep.subr.mxu0 %v78
    %142 = vmatpush1.msra.mxu0 %v77
    %143 = vmatprep.subr.mxu0 %v80
    %144 = vmatpush1.msra.mxu0 %v79
    %145 = vmatprep.subr.mxu0 %v82
    %146 = vmatpush1.msra.mxu0 %v81
    %147 = vmatprep.mubr.f32.mxu0 %v16
    %148 = vmatmul.mubr.f32.gmra.mrb[0].mxu0 %v15
    %v149 = vpop.f32.mrb[0].mxu0
    %v150 = vadd.f32 0.0, %v149
    %v151 = vpop.f32.mrb[0].mxu0
    %v152 = vadd.f32 0.0, %v151
    %153 = vmatprep.mubr.f32.mxu0 %v18
    %154 = vmatmul.mubr.f32.gmra.mrb[0].mxu0 %v17
    %v155 = vpop.f32.mrb[0].mxu0
    %v156 = vadd.f32 0.0, %v155
    %v157 = vpop.f32.mrb[0].mxu0
    %v158 = vadd.f32 0.0, %v157
    %159 = vdwg.mxu0
    %v160 = vmax.f32 %v150, 0.0
    %v161 = vmax.f32 %v152, 0.0
    %v162 = vmax.f32 %v156, 0.0
    %v163 = vmax.f32 %v158, 0.0
    %v164 = vmin.f32 %v160, 6.0
    %v165 = vmin.f32 %v161, 6.0
    %v166 = vmin.f32 %v162, 6.0
    %v167 = vmin.f32 %v163, 6.0
    %v172 = vrot.slane %v164, 7
    %v173 = vrot.slane %v165, 7
    %v174 = vrot.slane %v166, 7
    %v175 = vrot.slane %v167, 7
    %vm180 = vcmask 1040384
    %v181 = vsel %vm180, 0.0, %v172
    %v182 = vsel %vm180, 0.0, %v173
    %v183 = vsel %vm180, 0.0, %v174
    %v184 = vsel %vm180, 0.0, %v175
    %v185 = vsel %vm180, %v172, 0.0
    %v186 = vsel %vm180, %v173, 0.0
    %v187 = vsel %vm180, %v174, 0.0
    %v188 = vsel %vm180, %v175, 0.0
    %v197 = vcombine.low %v181, %v182
    %v198 = vcombine.high %v181, %v182
    %v200 = vunpack.c.l.s4 1983009808
    %v201 = vunpack.c.0.s8 %v200
    %v202 = vlaneseq
    %v203 = vshrl.u32 %v202, 7
    %v204 = vsub.s32 %v201, %v203
    %v205 = vrot.slane %v197, %v204
    %v207 = vunpack.c.l.s4 1983009808
    %v208 = vunpack.c.0.s8 %v207
    %v209 = vlaneseq
    %v210 = vshrl.u32 %v209, 7
    %v211 = vsub.s32 %v208, %v210
    %v212 = vrot.slane %v198, %v211
    %v213 = vcombine.high %v205, %v205
    %v214 = vcombine.high %v212, %v212
    %v215 = vcombine.low %v185, %v186
    %v217 = vunpack.c.l.s4 1983009808
    %v218 = vunpack.c.0.s8 %v217
    %v219 = vlaneseq
    %v220 = vshrl.u32 %v219, 7
    %v221 = vsub.s32 %v218, %v220
    %v222 = vrot.slane %v215, %v221
    %v223 = vcombine.low %v183, %v184
    %v224 = vcombine.high %v183, %v184
    %v226 = vunpack.c.l.s4 1983009808
    %v227 = vunpack.c.0.s8 %v226
    %v228 = vlaneseq
    %v229 = vshrl.u32 %v228, 7
    %v230 = vsub.s32 %v227, %v229
    %v231 = vrot.slane %v223, %v230
    %v233 = vunpack.c.l.s4 1983009808
    %v234 = vunpack.c.0.s8 %v233
    %v235 = vlaneseq
    %v236 = vshrl.u32 %v235, 7
    %v237 = vsub.s32 %v234, %v236
    %v238 = vrot.slane %v224, %v237
    %v239 = vcombine.high %v231, %v231
    %v240 = vcombine.high %v238, %v238
    %v241 = vcombine.low %v187, %v188
    %v243 = vunpack.c.l.s4 1983009808
    %v244 = vunpack.c.0.s8 %v243
    %v245 = vlaneseq
    %v246 = vshrl.u32 %v245, 7
    %v247 = vsub.s32 %v244, %v246
    %v248 = vrot.slane %v241, %v247
    %v249 = vcombine.low %v205, %v213
    %v250 = vcombine.low %v212, %v214
    %v252 = vunpack.c.l.s4 1983009808
    %v253 = vunpack.c.0.s8 %v252
    %v254 = vlaneseq
    %v255 = vshrl.u32 %v254, 7
    %v256 = vsub.s32 %v253, %v255
    %v257 = vrot.slane %v249, %v256
    %v259 = vunpack.c.l.s4 1983009808
    %v260 = vunpack.c.0.s8 %v259
    %v261 = vlaneseq
    %v262 = vshrl.u32 %v261, 7
    %v263 = vsub.s32 %v260, %v262
    %v264 = vrot.slane %v250, %v263
    %v265 = vcombine.low %v257, %v264
    %v266 = vcombine.high %v257, %v264
    %v267 = vcombine.low %v222, %v231
    %v268 = vcombine.low %v239, %v238
    %v270 = vunpack.c.l.s4 1983009808
    %v271 = vunpack.c.0.s8 %v270
    %v272 = vlaneseq
    %v273 = vshrl.u32 %v272, 7
    %v274 = vsub.s32 %v271, %v273
    %v275 = vrot.slane %v267, %v274
    %v277 = vunpack.c.l.s4 1983009808
    %v278 = vunpack.c.0.s8 %v277
    %v279 = vlaneseq
    %v280 = vshrl.u32 %v279, 7
    %v281 = vsub.s32 %v278, %v280
    %v282 = vrot.slane %v268, %v281
    %v283 = vcombine.low %v275, %v282
    %v284 = vcombine.high %v275, %v282
    %v285 = vcombine.low %v240, %v248
    %v287 = vunpack.c.l.s4 1983009808
    %v288 = vunpack.c.0.s8 %v287
    %v289 = vlaneseq
    %v290 = vshrl.u32 %v289, 7
    %v291 = vsub.s32 %v288, %v290
    %v292 = vrot.slane %v285, %v291
    %v293 = vcombine.high %v292, %v292
    %300 = vrot.lane.b32.xlu0 %v265, 32
    %v301 = vpop.permute.xlu0 %300
    %302 = vrot.lane.b32.xlu0 %v283, 32
    %v303 = vpop.permute.xlu0 %302
    %304 = vrot.lane.b32.xlu0 %v292, 32
    %v305 = vpop.permute.xlu0 %304
    %306 = vrot.lane.b32.xlu0 %v266, 32
    %v307 = vpop.permute.xlu0 %306
    %308 = vrot.lane.b32.xlu0 %v284, 32
    %v309 = vpop.permute.xlu0 %308
    %310 = vrot.lane.b32.xlu0 %v293, 32
    %v311 = vpop.permute.xlu0 %310
    %v312 = vlaneseq
    %v313 = vand.u32 %v312, 127
    %vm314 = vcmp.lt.s32.totalorder %v313, 32
    %v315 = vsel %vm314, %v301, %v307
    %v316 = vsel %vm314, %v303, %v309
    %v317 = vsel %vm314, %v305, %v311
    %v318 = vsel %vm314, %v307, %v301
    %v319 = vsel %vm314, %v309, %v303
    %v320 = vsel %vm314, %v311, %v305
    %v327 = vcombine.low %v318, %v315
    %v328 = vcombine.high %v318, %v315
    %v330 = vunpack.c.l.s4 1983009808
    %v331 = vunpack.c.0.s8 %v330
    %v332 = vlaneseq
    %v333 = vshrl.u32 %v332, 7
    %v334 = vsub.s32 %v331, %v333
    %v335 = vrot.slane %v327, %v334
    %v337 = vunpack.c.l.s4 1983009808
    %v338 = vunpack.c.0.s8 %v337
    %v339 = vlaneseq
    %v340 = vshrl.u32 %v339, 7
    %v341 = vsub.s32 %v338, %v340
    %v342 = vrot.slane %v328, %v341
    %v343 = vcombine.high %v335, %v335
    %v344 = vcombine.high %v342, %v342
    %v345 = vcombine.low %v319, %v316
    %v346 = vcombine.high %v319, %v316
    %v348 = vunpack.c.l.s4 1983009808
    %v349 = vunpack.c.0.s8 %v348
    %v350 = vlaneseq
    %v351 = vshrl.u32 %v350, 7
    %v352 = vsub.s32 %v349, %v351
    %v353 = vrot.slane %v345, %v352
    %v355 = vunpack.c.l.s4 1983009808
    %v356 = vunpack.c.0.s8 %v355
    %v357 = vlaneseq
    %v358 = vshrl.u32 %v357, 7
    %v359 = vsub.s32 %v356, %v358
    %v360 = vrot.slane %v346, %v359
    %v361 = vcombine.high %v353, %v353
    %v362 = vcombine.high %v360, %v360
    %v363 = vcombine.low %v320, %v317
    %v365 = vunpack.c.l.s4 1983009808
    %v366 = vunpack.c.0.s8 %v365
    %v367 = vlaneseq
    %v368 = vshrl.u32 %v367, 7
    %v369 = vsub.s32 %v366, %v368
    %v370 = vrot.slane %v363, %v369
    %v371 = vcombine.high %v370, %v370
    %382 = vrot.lane.b32.xlu0 %v265, 96
    %v383 = vpop.permute.xlu0 %382
    %384 = vrot.lane.b32.xlu0 %v283, 96
    %v385 = vpop.permute.xlu0 %384
    %386 = vrot.lane.b32.xlu0 %v292, 96
    %v387 = vpop.permute.xlu0 %386
    %388 = vrot.lane.b32.xlu0 %v266, 96
    %v389 = vpop.permute.xlu0 %388
    %390 = vrot.lane.b32.xlu0 %v284, 96
    %v391 = vpop.permute.xlu0 %390
    %392 = vrot.lane.b32.xlu0 %v293, 96
    %v393 = vpop.permute.xlu0 %392
    %vm394 = vcmp.lt.s32.totalorder %v313, 96
    %v395 = vsel %vm394, %v383, %v389
    %v396 = vsel %vm394, %v385, %v391
    %v397 = vsel %vm394, %v387, %v393
    %v398 = vsel %vm394, %v389, %v383
    %v399 = vsel %vm394, %v391, %v385
    %v400 = vsel %vm394, %v393, %v387
    %v407 = vcombine.low %v395, %v398
    %v408 = vcombine.high %v395, %v398
    %v410 = vunpack.c.l.s4 1983009808
    %v411 = vunpack.c.0.s8 %v410
    %v412 = vlaneseq
    %v413 = vshrl.u32 %v412, 7
    %v414 = vsub.s32 %v411, %v413
    %v415 = vrot.slane %v407, %v414
    %v417 = vunpack.c.l.s4 1983009808
    %v418 = vunpack.c.0.s8 %v417
    %v419 = vlaneseq
    %v420 = vshrl.u32 %v419, 7
    %v421 = vsub.s32 %v418, %v420
    %v422 = vrot.slane %v408, %v421
    %v423 = vcombine.high %v415, %v415
    %v424 = vcombine.high %v422, %v422
    %v425 = vcombine.low %v396, %v399
    %v426 = vcombine.high %v396, %v399
    %v428 = vunpack.c.l.s4 1983009808
    %v429 = vunpack.c.0.s8 %v428
    %v430 = vlaneseq
    %v431 = vshrl.u32 %v430, 7
    %v432 = vsub.s32 %v429, %v431
    %v433 = vrot.slane %v425, %v432
    %v435 = vunpack.c.l.s4 1983009808
    %v436 = vunpack.c.0.s8 %v435
    %v437 = vlaneseq
    %v438 = vshrl.u32 %v437, 7
    %v439 = vsub.s32 %v436, %v438
    %v440 = vrot.slane %v426, %v439
    %v441 = vcombine.high %v433, %v433
    %v442 = vcombine.high %v440, %v440
    %v443 = vcombine.low %v397, %v400
    %v445 = vunpack.c.l.s4 1983009808
    %v446 = vunpack.c.0.s8 %v445
    %v447 = vlaneseq
    %v448 = vshrl.u32 %v447, 7
    %v449 = vsub.s32 %v446, %v448
    %v450 = vrot.slane %v443, %v449
    %v451 = vcombine.high %v450, %v450
    %v462 = vld [vmem:[%s1 + $0x200] sm:$0xff]
    %v463 = vld [vmem:[%s1 + $0x208] sm:$0xff]
    %v464 = vld [vmem:[%s1 + $0x210] sm:$0x1]
    %v465 = vld [vmem:[%s1 + $0x218] sm:$0x1]
    %s466 = scalar_lea.vmem %s1, 544
    %v467 = vld [vmem:[%s466] ss:$8 sm:$0x3]
    %v468 = vlaneseq
    %v469 = vshrl.u32 %v468, 7
    %v470 = vsub.s32 0, %v469
    %v471 = vrot.slane %v462, %v470
    %v472 = vlaneseq
    %v473 = vshrl.u32 %v472, 7
    %v474 = vsub.s32 0, %v473
    %v475 = vrot.slane %v463, %v474
    %v478 = vcombine.low %v471, %v475
    %v479 = vcombine.high %v471, %v475
    %v481 = vunpack.c.l.s4 1983009808
    %v482 = vunpack.c.0.s8 %v481
    %v483 = vlaneseq
    %v484 = vshrl.u32 %v483, 7
    %v485 = vsub.s32 %v482, %v484
    %v486 = vrot.slane %v478, %v485
    %v488 = vunpack.c.l.s4 1983009808
    %v489 = vunpack.c.0.s8 %v488
    %v490 = vlaneseq
    %v491 = vshrl.u32 %v490, 7
    %v492 = vsub.s32 %v489, %v491
    %v493 = vrot.slane %v479, %v492
    %v494 = vcombine.high %v486, %v486
    %v495 = vcombine.high %v493, %v493
    %v500 = vmul.f32 %v335, %v486
    %v501 = vmul.f32 %v343, %v494
    %v502 = vmul.f32 %v342, %v493
    %v503 = vmul.f32 %v344, %v495
    %v504 = vmul.f32 %v361, %v486
    %v505 = vmul.f32 %v360, %v494
    %v506 = vmul.f32 %v362, %v493
    %v507 = vmul.f32 %v370, %v495
    %v508 = vlaneseq
    %v509 = vshrl.u32 %v508, 7
    %v510 = vsub.s32 1, %v509
    %v511 = vrot.slane %v462, %v510
    %v512 = vlaneseq
    %v513 = vshrl.u32 %v512, 7
    %v514 = vsub.s32 1, %v513
    %v515 = vrot.slane %v463, %v514
    %v516 = vmul.f32 %v181, %v511
    %v517 = vmul.f32 %v182, %v515
    %v518 = vmul.f32 %v183, %v511
    %v519 = vmul.f32 %v184, %v515
    %v524 = vcombine.low %v516, %v517
    %v525 = vcombine.high %v516, %v517
    %v527 = vunpack.c.l.s4 1983009808
    %v528 = vunpack.c.0.s8 %v527
    %v529 = vlaneseq
    %v530 = vshrl.u32 %v529, 7
    %v531 = vsub.s32 %v528, %v530
    %v532 = vrot.slane %v524, %v531
    %v534 = vunpack.c.l.s4 1983009808
    %v535 = vunpack.c.0.s8 %v534
    %v536 = vlaneseq
    %v537 = vshrl.u32 %v536, 7
    %v538 = vsub.s32 %v535, %v537
    %v539 = vrot.slane %v525, %v538
    %v540 = vcombine.high %v532, %v532
    %v541 = vcombine.high %v539, %v539
    %v542 = vcombine.low %v518, %v519
    %v543 = vcombine.high %v518, %v519
    %v545 = vunpack.c.l.s4 1983009808
    %v546 = vunpack.c.0.s8 %v545
    %v547 = vlaneseq
    %v548 = vshrl.u32 %v547, 7
    %v549 = vsub.s32 %v546, %v548
    %v550 = vrot.slane %v542, %v549
    %v552 = vunpack.c.l.s4 1983009808
    %v553 = vunpack.c.0.s8 %v552
    %v554 = vlaneseq
    %v555 = vshrl.u32 %v554, 7
    %v556 = vsub.s32 %v553, %v555
    %v557 = vrot.slane %v543, %v556
    %v558 = vcombine.high %v550, %v550
    %v559 = vcombine.high %v557, %v557
    %v568 = vadd.f32 %v500, %v532
    %v569 = vadd.f32 %v501, %v540
    %v570 = vadd.f32 %v502, %v539
    %v571 = vadd.f32 %v503, %v541
    %v572 = vadd.f32 %v504, %v550
    %v573 = vadd.f32 %v505, %v558
    %v574 = vadd.f32 %v506, %v557
    %v575 = vadd.f32 %v507, %v559
    %v576 = vlaneseq
    %v577 = vshrl.u32 %v576, 7
    %v578 = vsub.s32 2, %v577
    %v579 = vrot.slane %v462, %v578
    %v580 = vlaneseq
    %v581 = vshrl.u32 %v580, 7
    %v582 = vsub.s32 2, %v581
    %v583 = vrot.slane %v463, %v582
    %v586 = vcombine.low %v579, %v583
    %v587 = vcombine.high %v579, %v583
    %v589 = vunpack.c.l.s4 1983009808
    %v590 = vunpack.c.0.s8 %v589
    %v591 = vlaneseq
    %v592 = vshrl.u32 %v591, 7
    %v593 = vsub.s32 %v590, %v592
    %v594 = vrot.slane %v586, %v593
    %v596 = vunpack.c.l.s4 1983009808
    %v597 = vunpack.c.0.s8 %v596
    %v598 = vlaneseq
    %v599 = vshrl.u32 %v598, 7
    %v600 = vsub.s32 %v597, %v599
    %v601 = vrot.slane %v587, %v600
    %v602 = vcombine.high %v594, %v594
    %v603 = vcombine.high %v601, %v601
    %v608 = vmul.f32 %v415, %v594
    %v609 = vmul.f32 %v423, %v602
    %v610 = vmul.f32 %v422, %v601
    %v611 = vmul.f32 %v424, %v603
    %v612 = vmul.f32 %v441, %v594
    %v613 = vmul.f32 %v440, %v602
    %v614 = vmul.f32 %v442, %v601
    %v615 = vmul.f32 %v450, %v603
    %v616 = vadd.f32 %v568, %v608
    %v617 = vadd.f32 %v569, %v609
    %v618 = vadd.f32 %v570, %v610
    %v619 = vadd.f32 %v571, %v611
    %v620 = vadd.f32 %v572, %v612
    %v621 = vadd.f32 %v573, %v613
    %v622 = vadd.f32 %v574, %v614
    %v623 = vadd.f32 %v575, %v615
    %v624 = vlaneseq
    %v625 = vshrl.u32 %v624, 7
    %v626 = vsub.s32 3, %v625
    %v627 = vrot.slane %v462, %v626
    %v628 = vlaneseq
    %v629 = vshrl.u32 %v628, 7
    %v630 = vsub.s32 3, %v629
    %v631 = vrot.slane %v463, %v630
    %v634 = vcombine.low %v627, %v631
    %v635 = vcombine.high %v627, %v631
    %v637 = vunpack.c.l.s4 1983009808
    %v638 = vunpack.c.0.s8 %v637
    %v639 = vlaneseq
    %v640 = vshrl.u32 %v639, 7
    %v641 = vsub.s32 %v638, %v640
    %v642 = vrot.slane %v634, %v641
    %v644 = vunpack.c.l.s4 1983009808
    %v645 = vunpack.c.0.s8 %v644
    %v646 = vlaneseq
    %v647 = vshrl.u32 %v646, 7
    %v648 = vsub.s32 %v645, %v647
    %v649 = vrot.slane %v635, %v648
    %v650 = vcombine.high %v642, %v642
    %v651 = vcombine.high %v649, %v649
    %vm652 = vcmask 1042434
    %vm653 = vmor %vm180, %vm652
    %vm654 = vcmask 1044484
    %vm655 = vmor %vm653, %vm654
    %vm656 = vcmask 1046534
    %vm657 = vmor %vm655, %vm656
    %v658 = vrot.slane %v642, 7
    %v659 = vrot.slane %v658, 2
    %v660 = vrot.slane %v650, 7
    %v661 = vsel %vm657, %v659, %v660
    %v662 = vrot.slane %v660, 2
    %v663 = vrot.slane %v649, 7
    %v664 = vsel %vm657, %v662, %v663
    %v665 = vrot.slane %v663, 2
    %v666 = vrot.slane %v651, 7
    %v667 = vsel %vm657, %v665, %v666
    %v668 = vrot.slane %v666, 2
    %v674 = vmul.f32 %v335, %v658
    %v675 = vmul.f32 %v343, %v661
    %v676 = vmul.f32 %v342, %v664
    %v677 = vmul.f32 %v344, %v667
    %v678 = vmul.f32 %v353, %v668
    %v679 = vmul.f32 %v361, %v658
    %v680 = vmul.f32 %v360, %v661
    %v681 = vmul.f32 %v362, %v664
    %v682 = vmul.f32 %v370, %v667
    %v683 = vmul.f32 %v371, %v668
    %v694 = vrot.slane %v674, 7
    %v695 = vrot.slane %v694, 2
    %v696 = vrot.slane %v675, 7
    %v697 = vsel %vm657, %v695, %v696
    %v698 = vrot.slane %v696, 2
    %v699 = vrot.slane %v676, 7
    %v700 = vsel %vm657, %v698, %v699
    %v701 = vrot.slane %v699, 2
    %v702 = vrot.slane %v677, 7
    %v703 = vsel %vm657, %v701, %v702
    %v704 = vrot.slane %v702, 2
    %v705 = vrot.slane %v678, 7
    %v706 = vsel %vm657, %v704, %v705
    %v707 = vrot.slane %v679, 7
    %v708 = vrot.slane %v707, 2
    %v709 = vrot.slane %v680, 7
    %v710 = vsel %vm657, %v708, %v709
    %v711 = vrot.slane %v709, 2
    %v712 = vrot.slane %v681, 7
    %v713 = vsel %vm657, %v711, %v712
    %v714 = vrot.slane %v712, 2
    %v715 = vrot.slane %v682, 7
    %v716 = vsel %vm657, %v714, %v715
    %v717 = vrot.slane %v715, 2
    %v718 = vrot.slane %v683, 7
    %v719 = vsel %vm657, %v717, %v718
    %v728 = vadd.f32 %v616, %v697
    %v729 = vadd.f32 %v617, %v700
    %v730 = vadd.f32 %v618, %v703
    %v731 = vadd.f32 %v619, %v706
    %v732 = vadd.f32 %v620, %v710
    %v733 = vadd.f32 %v621, %v713
    %v734 = vadd.f32 %v622, %v716
    %v735 = vadd.f32 %v623, %v719
    %v736 = vlaneseq
    %v737 = vshrl.u32 %v736, 7
    %v738 = vsub.s32 4, %v737
    %v739 = vrot.slane %v462, %v738
    %v740 = vlaneseq
    %v741 = vshrl.u32 %v740, 7
    %v742 = vsub.s32 4, %v741
    %v743 = vrot.slane %v463, %v742
    %v744 = vmul.f32 %v181, %v739
    %v745 = vmul.f32 %v182, %v743
    %v746 = vmul.f32 %v185, %v739
    %v747 = vmul.f32 %v186, %v743
    %v748 = vmul.f32 %v183, %v739
    %v749 = vmul.f32 %v184, %v743
    %v750 = vmul.f32 %v187, %v739
    %v751 = vmul.f32 %v188, %v743
    %v760 = vcombine.low %v744, %v745
    %v761 = vcombine.high %v744, %v745
    %v763 = vunpack.c.l.s4 1983009808
    %v764 = vunpack.c.0.s8 %v763
    %v765 = vlaneseq
    %v766 = vshrl.u32 %v765, 7
    %v767 = vsub.s32 %v764, %v766
    %v768 = vrot.slane %v760, %v767
    %v770 = vunpack.c.l.s4 1983009808
    %v771 = vunpack.c.0.s8 %v770
    %v772 = vlaneseq
    %v773 = vshrl.u32 %v772, 7
    %v774 = vsub.s32 %v771, %v773
    %v775 = vrot.slane %v761, %v774
    %v776 = vcombine.high %v768, %v768
    %v777 = vcombine.high %v775, %v775
    %v778 = vcombine.low %v746, %v747
    %v780 = vunpack.c.l.s4 1983009808
    %v781 = vunpack.c.0.s8 %v780
    %v782 = vlaneseq
    %v783 = vshrl.u32 %v782, 7
    %v784 = vsub.s32 %v781, %v783
    %v785 = vrot.slane %v778, %v784
    %v786 = vcombine.low %v748, %v749
    %v787 = vcombine.high %v748, %v749
    %v789 = vunpack.c.l.s4 1983009808
    %v790 = vunpack.c.0.s8 %v789
    %v791 = vlaneseq
    %v792 = vshrl.u32 %v791, 7
    %v793 = vsub.s32 %v790, %v792
    %v794 = vrot.slane %v786, %v793
    %v796 = vunpack.c.l.s4 1983009808
    %v797 = vunpack.c.0.s8 %v796
    %v798 = vlaneseq
    %v799 = vshrl.u32 %v798, 7
    %v800 = vsub.s32 %v797, %v799
    %v801 = vrot.slane %v787, %v800
    %v802 = vcombine.high %v794, %v794
    %v803 = vcombine.high %v801, %v801
    %v804 = vcombine.low %v750, %v751
    %v806 = vunpack.c.l.s4 1983009808
    %v807 = vunpack.c.0.s8 %v806
    %v808 = vlaneseq
    %v809 = vshrl.u32 %v808, 7
    %v810 = vsub.s32 %v807, %v809
    %v811 = vrot.slane %v804, %v810
    %v812 = vrot.slane %v768, 7
    %v813 = vrot.slane %v812, 2
    %v814 = vrot.slane %v776, 7
    %v815 = vsel %vm657, %v813, %v814
    %v816 = vrot.slane %v814, 2
    %v817 = vrot.slane %v775, 7
    %v818 = vsel %vm657, %v816, %v817
    %v819 = vrot.slane %v817, 2
    %v820 = vrot.slane %v777, 7
    %v821 = vsel %vm657, %v819, %v820
    %v822 = vrot.slane %v820, 2
    %v823 = vrot.slane %v785, 7
    %v824 = vsel %vm657, %v822, %v823
    %v825 = vrot.slane %v794, 7
    %v826 = vrot.slane %v825, 2
    %v827 = vrot.slane %v802, 7
    %v828 = vsel %vm657, %v826, %v827
    %v829 = vrot.slane %v827, 2
    %v830 = vrot.slane %v801, 7
    %v831 = vsel %vm657, %v829, %v830
    %v832 = vrot.slane %v830, 2
    %v833 = vrot.slane %v803, 7
    %v834 = vsel %vm657, %v832, %v833
    %v835 = vrot.slane %v833, 2
    %v836 = vrot.slane %v811, 7
    %v837 = vsel %vm657, %v835, %v836
    %v846 = vadd.f32 %v728, %v815
    %v847 = vadd.f32 %v729, %v818
    %v848 = vadd.f32 %v730, %v821
    %v849 = vadd.f32 %v731, %v824
    %v850 = vadd.f32 %v732, %v828
    %v851 = vadd.f32 %v733, %v831
    %v852 = vadd.f32 %v734, %v834
    %v853 = vadd.f32 %v735, %v837
    %v854 = vlaneseq
    %v855 = vshrl.u32 %v854, 7
    %v856 = vsub.s32 5, %v855
    %v857 = vrot.slane %v462, %v856
    %v858 = vlaneseq
    %v859 = vshrl.u32 %v858, 7
    %v860 = vsub.s32 5, %v859
    %v861 = vrot.slane %v463, %v860
    %v864 = vcombine.low %v857, %v861
    %v865 = vcombine.high %v857, %v861
    %v867 = vunpack.c.l.s4 1983009808
    %v868 = vunpack.c.0.s8 %v867
    %v869 = vlaneseq
    %v870 = vshrl.u32 %v869, 7
    %v871 = vsub.s32 %v868, %v870
    %v872 = vrot.slane %v864, %v871
    %v874 = vunpack.c.l.s4 1983009808
    %v875 = vunpack.c.0.s8 %v874
    %v876 = vlaneseq
    %v877 = vshrl.u32 %v876, 7
    %v878 = vsub.s32 %v875, %v877
    %v879 = vrot.slane %v865, %v878
    %v880 = vcombine.high %v872, %v872
    %v881 = vcombine.high %v879, %v879
    %v882 = vrot.slane %v872, 7
    %v883 = vrot.slane %v882, 2
    %v884 = vrot.slane %v880, 7
    %v885 = vsel %vm657, %v883, %v884
    %v886 = vrot.slane %v884, 2
    %v887 = vrot.slane %v879, 7
    %v888 = vsel %vm657, %v886, %v887
    %v889 = vrot.slane %v887, 2
    %v890 = vrot.slane %v881, 7
    %v891 = vsel %vm657, %v889, %v890
    %v892 = vrot.slane %v890, 2
    %v898 = vmul.f32 %v415, %v882
    %v899 = vmul.f32 %v423, %v885
    %v900 = vmul.f32 %v422, %v888
    %v901 = vmul.f32 %v424, %v891
    %v902 = vmul.f32 %v433, %v892
    %v903 = vmul.f32 %v441, %v882
    %v904 = vmul.f32 %v440, %v885
    %v905 = vmul.f32 %v442, %v888
    %v906 = vmul.f32 %v450, %v891
    %v907 = vmul.f32 %v451, %v892
    %v918 = vrot.slane %v898, 7
    %v919 = vrot.slane %v918, 2
    %v920 = vrot.slane %v899, 7
    %v921 = vsel %vm657, %v919, %v920
    %v922 = vrot.slane %v920, 2
    %v923 = vrot.slane %v900, 7
    %v924 = vsel %vm657, %v922, %v923
    %v925 = vrot.slane %v923, 2
    %v926 = vrot.slane %v901, 7
    %v927 = vsel %vm657, %v925, %v926
    %v928 = vrot.slane %v926, 2
    %v929 = vrot.slane %v902, 7
    %v930 = vsel %vm657, %v928, %v929
    %v931 = vrot.slane %v903, 7
    %v932 = vrot.slane %v931, 2
    %v933 = vrot.slane %v904, 7
    %v934 = vsel %vm657, %v932, %v933
    %v935 = vrot.slane %v933, 2
    %v936 = vrot.slane %v905, 7
    %v937 = vsel %vm657, %v935, %v936
    %v938 = vrot.slane %v936, 2
    %v939 = vrot.slane %v906, 7
    %v940 = vsel %vm657, %v938, %v939
    %v941 = vrot.slane %v939, 2
    %v942 = vrot.slane %v907, 7
    %v943 = vsel %vm657, %v941, %v942
    %v952 = vadd.f32 %v846, %v921
    %v953 = vadd.f32 %v847, %v924
    %v954 = vadd.f32 %v848, %v927
    %v955 = vadd.f32 %v849, %v930
    %v956 = vadd.f32 %v850, %v934
    %v957 = vadd.f32 %v851, %v937
    %v958 = vadd.f32 %v852, %v940
    %v959 = vadd.f32 %v853, %v943
    %v960 = vlaneseq
    %v961 = vshrl.u32 %v960, 7
    %v962 = vsub.s32 6, %v961
    %v963 = vrot.slane %v462, %v962
    %v964 = vlaneseq
    %v965 = vshrl.u32 %v964, 7
    %v966 = vsub.s32 6, %v965
    %v967 = vrot.slane %v463, %v966
    %v970 = vcombine.low %v963, %v967
    %v971 = vcombine.high %v963, %v967
    %v973 = vunpack.c.l.s4 1983009808
    %v974 = vunpack.c.0.s8 %v973
    %v975 = vlaneseq
    %v976 = vshrl.u32 %v975, 7
    %v977 = vsub.s32 %v974, %v976
    %v978 = vrot.slane %v970, %v977
    %v980 = vunpack.c.l.s4 1983009808
    %v981 = vunpack.c.0.s8 %v980
    %v982 = vlaneseq
    %v983 = vshrl.u32 %v982, 7
    %v984 = vsub.s32 %v981, %v983
    %v985 = vrot.slane %v971, %v984
    %v986 = vcombine.high %v978, %v978
    %v987 = vcombine.high %v985, %v985
    %v992 = vmul.f32 %v343, %v978
    %v993 = vmul.f32 %v342, %v986
    %v994 = vmul.f32 %v344, %v985
    %v995 = vmul.f32 %v353, %v987
    %v996 = vmul.f32 %v360, %v978
    %v997 = vmul.f32 %v362, %v986
    %v998 = vmul.f32 %v370, %v985
    %v999 = vmul.f32 %v371, %v987
    %v1000 = vadd.f32 %v952, %v992
    %v1001 = vadd.f32 %v953, %v993
    %v1002 = vadd.f32 %v954, %v994
    %v1003 = vadd.f32 %v955, %v995
    %v1004 = vadd.f32 %v956, %v996
    %v1005 = vadd.f32 %v957, %v997
    %v1006 = vadd.f32 %v958, %v998
    %v1007 = vadd.f32 %v959, %v999
    %v1008 = vlaneseq
    %v1009 = vshrl.u32 %v1008, 7
    %v1010 = vsub.s32 7, %v1009
    %v1011 = vrot.slane %v462, %v1010
    %v1012 = vlaneseq
    %v1013 = vshrl.u32 %v1012, 7
    %v1014 = vsub.s32 7, %v1013
    %v1015 = vrot.slane %v463, %v1014
    %v1016 = vmul.f32 %v181, %v1011
    %v1017 = vmul.f32 %v182, %v1015
    %v1018 = vmul.f32 %v185, %v1011
    %v1019 = vmul.f32 %v186, %v1015
    %v1020 = vmul.f32 %v183, %v1011
    %v1021 = vmul.f32 %v184, %v1015
    %v1022 = vmul.f32 %v187, %v1011
    %v1023 = vmul.f32 %v188, %v1015
    %v1032 = vcombine.low %v1016, %v1017
    %v1033 = vcombine.high %v1016, %v1017
    %v1035 = vunpack.c.l.s4 1983009808
    %v1036 = vunpack.c.0.s8 %v1035
    %v1037 = vlaneseq
    %v1038 = vshrl.u32 %v1037, 7
    %v1039 = vsub.s32 %v1036, %v1038
    %v1040 = vrot.slane %v1032, %v1039
    %v1042 = vunpack.c.l.s4 1983009808
    %v1043 = vunpack.c.0.s8 %v1042
    %v1044 = vlaneseq
    %v1045 = vshrl.u32 %v1044, 7
    %v1046 = vsub.s32 %v1043, %v1045
    %v1047 = vrot.slane %v1033, %v1046
    %v1048 = vcombine.high %v1040, %v1040
    %v1049 = vcombine.high %v1047, %v1047
    %v1050 = vcombine.low %v1018, %v1019
    %v1052 = vunpack.c.l.s4 1983009808
    %v1053 = vunpack.c.0.s8 %v1052
    %v1054 = vlaneseq
    %v1055 = vshrl.u32 %v1054, 7
    %v1056 = vsub.s32 %v1053, %v1055
    %v1057 = vrot.slane %v1050, %v1056
    %v1058 = vcombine.low %v1020, %v1021
    %v1059 = vcombine.high %v1020, %v1021
    %v1061 = vunpack.c.l.s4 1983009808
    %v1062 = vunpack.c.0.s8 %v1061
    %v1063 = vlaneseq
    %v1064 = vshrl.u32 %v1063, 7
    %v1065 = vsub.s32 %v1062, %v1064
    %v1066 = vrot.slane %v1058, %v1065
    %v1068 = vunpack.c.l.s4 1983009808
    %v1069 = vunpack.c.0.s8 %v1068
    %v1070 = vlaneseq
    %v1071 = vshrl.u32 %v1070, 7
    %v1072 = vsub.s32 %v1069, %v1071
    %v1073 = vrot.slane %v1059, %v1072
    %v1074 = vcombine.high %v1066, %v1066
    %v1075 = vcombine.high %v1073, %v1073
    %v1076 = vcombine.low %v1022, %v1023
    %v1078 = vunpack.c.l.s4 1983009808
    %v1079 = vunpack.c.0.s8 %v1078
    %v1080 = vlaneseq
    %v1081 = vshrl.u32 %v1080, 7
    %v1082 = vsub.s32 %v1079, %v1081
    %v1083 = vrot.slane %v1076, %v1082
    %v1092 = vadd.f32 %v1000, %v1048
    %v1093 = vadd.f32 %v1001, %v1047
    %v1094 = vadd.f32 %v1002, %v1049
    %v1095 = vadd.f32 %v1003, %v1057
    %v1096 = vadd.f32 %v1004, %v1074
    %v1097 = vadd.f32 %v1005, %v1073
    %v1098 = vadd.f32 %v1006, %v1075
    %v1099 = vadd.f32 %v1007, %v1083
    %v1100 = vlaneseq
    %v1101 = vshrl.u32 %v1100, 7
    %v1102 = vsub.s32 0, %v1101
    %v1103 = vrot.slane %v464, %v1102
    %v1104 = vlaneseq
    %v1105 = vshrl.u32 %v1104, 7
    %v1106 = vsub.s32 0, %v1105
    %v1107 = vrot.slane %v465, %v1106
    %v1110 = vcombine.low %v1103, %v1107
    %v1111 = vcombine.high %v1103, %v1107
    %v1113 = vunpack.c.l.s4 1983009808
    %v1114 = vunpack.c.0.s8 %v1113
    %v1115 = vlaneseq
    %v1116 = vshrl.u32 %v1115, 7
    %v1117 = vsub.s32 %v1114, %v1116
    %v1118 = vrot.slane %v1110, %v1117
    %v1120 = vunpack.c.l.s4 1983009808
    %v1121 = vunpack.c.0.s8 %v1120
    %v1122 = vlaneseq
    %v1123 = vshrl.u32 %v1122, 7
    %v1124 = vsub.s32 %v1121, %v1123
    %v1125 = vrot.slane %v1111, %v1124
    %v1126 = vcombine.high %v1118, %v1118
    %v1127 = vcombine.high %v1125, %v1125
    %v1132 = vmul.f32 %v423, %v1118
    %v1133 = vmul.f32 %v422, %v1126
    %v1134 = vmul.f32 %v424, %v1125
    %v1135 = vmul.f32 %v433, %v1127
    %v1136 = vmul.f32 %v440, %v1118
    %v1137 = vmul.f32 %v442, %v1126
    %v1138 = vmul.f32 %v450, %v1125
    %v1139 = vmul.f32 %v451, %v1127
    %v1140 = vadd.f32 %v1092, %v1132
    %v1141 = vadd.f32 %v1093, %v1133
    %v1142 = vadd.f32 %v1094, %v1134
    %v1143 = vadd.f32 %v1095, %v1135
    %v1144 = vadd.f32 %v1096, %v1136
    %v1145 = vadd.f32 %v1097, %v1137
    %v1146 = vadd.f32 %v1098, %v1138
    %v1147 = vadd.f32 %v1099, %v1139
    %v1149 = vlaneseq
    %v1150 = vshrl.u32 %v1149, 7
    %v1151 = vsub.s32 0, %v1150
    %v1152 = vrot.slane %v467, %v1151
    %v1153 = vlaneseq
    %v1154 = vshrl.u32 %v1153, 7
    %v1155 = vsub.s32 1, %v1154
    %v1156 = vrot.slane %v467, %v1155
    %v1157 = vcombine.low %v1152, %v1156
    %v1158 = vcombine.high %v1152, %v1156
    %v1160 = vunpack.c.l.s4 1983009808
    %v1161 = vunpack.c.0.s8 %v1160
    %v1162 = vlaneseq
    %v1163 = vshrl.u32 %v1162, 7
    %v1164 = vsub.s32 %v1161, %v1163
    %v1165 = vrot.slane %v1157, %v1164
    %v1167 = vunpack.c.l.s4 1983009808
    %v1168 = vunpack.c.0.s8 %v1167
    %v1169 = vlaneseq
    %v1170 = vshrl.u32 %v1169, 7
    %v1171 = vsub.s32 %v1168, %v1170
    %v1172 = vrot.slane %v1158, %v1171
    %v1173 = vcombine.high %v1165, %v1165
    %v1174 = vcombine.high %v1172, %v1172
    %v1179 = vadd.f32 %v1140, %v1165
    %v1180 = vadd.f32 %v1141, %v1173
    %v1181 = vadd.f32 %v1142, %v1172
    %v1182 = vadd.f32 %v1143, %v1174
    %v1183 = vadd.f32 %v1144, %v1165
    %v1184 = vadd.f32 %v1145, %v1173
    %v1185 = vadd.f32 %v1146, %v1172
    %v1186 = vadd.f32 %v1147, %v1174
    %v1187 = vmax.f32 %v1179, 0.0
    %v1188 = vmax.f32 %v1180, 0.0
    %v1189 = vmax.f32 %v1181, 0.0
    %v1190 = vmax.f32 %v1182, 0.0
    %v1191 = vmax.f32 %v1183, 0.0
    %v1192 = vmax.f32 %v1184, 0.0
    %v1193 = vmax.f32 %v1185, 0.0
    %v1194 = vmax.f32 %v1186, 0.0
    %v1195 = vmin.f32 %v1187, 6.0
    %v1196 = vmin.f32 %v1188, 6.0
    %v1197 = vmin.f32 %v1189, 6.0
    %v1198 = vmin.f32 %v1190, 6.0
    %v1199 = vmin.f32 %v1191, 6.0
    %v1200 = vmin.f32 %v1192, 6.0
    %v1201 = vmin.f32 %v1193, 6.0
    %v1202 = vmin.f32 %v1194, 6.0
    %v1211 = vcombine.low %v1195, %v1196
    %v1212 = vcombine.low %v1197, %v1198
    %v1214 = vunpack.c.l.s4 1983009808
    %v1215 = vunpack.c.0.s8 %v1214
    %v1216 = vlaneseq
    %v1217 = vshrl.u32 %v1216, 7
    %v1218 = vsub.s32 %v1215, %v1217
    %v1219 = vrot.slane %v1211, %v1218
    %v1221 = vunpack.c.l.s4 1983009808
    %v1222 = vunpack.c.0.s8 %v1221
    %v1223 = vlaneseq
    %v1224 = vshrl.u32 %v1223, 7
    %v1225 = vsub.s32 %v1222, %v1224
    %v1226 = vrot.slane %v1212, %v1225
    %v1227 = vcombine.low %v1219, %v1226
    %v1228 = vcombine.high %v1219, %v1226
    %v1229 = vcombine.low %v1199, %v1200
    %v1230 = vcombine.low %v1201, %v1202
    %v1232 = vunpack.c.l.s4 1983009808
    %v1233 = vunpack.c.0.s8 %v1232
    %v1234 = vlaneseq
    %v1235 = vshrl.u32 %v1234, 7
    %v1236 = vsub.s32 %v1233, %v1235
    %v1237 = vrot.slane %v1229, %v1236
    %v1239 = vunpack.c.l.s4 1983009808
    %v1240 = vunpack.c.0.s8 %v1239
    %v1241 = vlaneseq
    %v1242 = vshrl.u32 %v1241, 7
    %v1243 = vsub.s32 %v1240, %v1242
    %v1244 = vrot.slane %v1230, %v1243
    %v1245 = vcombine.low %v1237, %v1244
    %v1246 = vcombine.high %v1237, %v1244
    %v1251 = vrot.slane %v1227, 4
    %v1252 = vadd.f32 %v1227, %v1251
    %v1253 = vrot.slane %v1252, 2
    %v1254 = vadd.f32 %v1252, %v1253
    %v1255 = vrot.slane %v1254, 1
    %v1256 = vadd.f32 %v1254, %v1255
    %v1257 = vrot.slane %v1228, 4
    %v1258 = vadd.f32 %v1228, %v1257
    %v1259 = vrot.slane %v1258, 2
    %v1260 = vadd.f32 %v1258, %v1259
    %v1261 = vrot.slane %v1260, 1
    %v1262 = vadd.f32 %v1260, %v1261
    %v1263 = vrot.slane %v1245, 4
    %v1264 = vadd.f32 %v1245, %v1263
    %v1265 = vrot.slane %v1264, 2
    %v1266 = vadd.f32 %v1264, %v1265
    %v1267 = vrot.slane %v1266, 1
    %v1268 = vadd.f32 %v1266, %v1267
    %v1269 = vrot.slane %v1246, 4
    %v1270 = vadd.f32 %v1246, %v1269
    %v1271 = vrot.slane %v1270, 2
    %v1272 = vadd.f32 %v1270, %v1271
    %v1273 = vrot.slane %v1272, 1
    %v1274 = vadd.f32 %v1272, %v1273
    %v1275 = vld [vmem:[%s2] sm:$0xff]
    %v1276 = vld [vmem:[%s2 + $0x8] sm:$0xff]
    %v1277 = vld [vmem:[%s2 + $0x10] sm:$0xff]
    %v1278 = vld [vmem:[%s2 + $0x18] sm:$0xff]
    %v1279 = vld [vmem:[%s2 + $0x20] sm:$0xff]
    %v1280 = vld [vmem:[%s2 + $0x28] sm:$0xff]
    %v1281 = vld [vmem:[%s2 + $0x30] sm:$0xff]
    %v1282 = vld [vmem:[%s2 + $0x38] sm:$0xff]
    %v1283 = vld [vmem:[%s2 + $0x40] sm:$0xff]
    %v1284 = vld [vmem:[%s2 + $0x48] sm:$0xff]
    %v1285 = vld [vmem:[%s2 + $0x50] sm:$0xff]
    %v1286 = vld [vmem:[%s2 + $0x58] sm:$0xff]
    %v1287 = vld [vmem:[%s2 + $0x60] sm:$0xff]
    %v1288 = vld [vmem:[%s2 + $0x68] sm:$0xff]
    %v1289 = vld [vmem:[%s2 + $0x70] sm:$0xff]
    %v1290 = vld [vmem:[%s2 + $0x78] sm:$0xff]
    %v1291 = vld [vmem:[%s2 + $0x80] sm:$0xff]
    %v1292 = vld [vmem:[%s2 + $0x88] sm:$0xff]
    %v1293 = vld [vmem:[%s2 + $0x90] sm:$0xff]
    %v1294 = vld [vmem:[%s2 + $0x98] sm:$0xff]
    %v1295 = vld [vmem:[%s2 + $0xa0] sm:$0xff]
    %v1296 = vld [vmem:[%s2 + $0xa8] sm:$0xff]
    %v1297 = vld [vmem:[%s2 + $0xb0] sm:$0xff]
    %v1298 = vld [vmem:[%s2 + $0xb8] sm:$0xff]
    %v1299 = vld [vmem:[%s2 + $0xc0] sm:$0xff]
    %v1300 = vld [vmem:[%s2 + $0xc8] sm:$0xff]
    %v1301 = vld [vmem:[%s2 + $0xd0] sm:$0xff]
    %v1302 = vld [vmem:[%s2 + $0xd8] sm:$0xff]
    %v1303 = vld [vmem:[%s2 + $0xe0] sm:$0xff]
    %v1304 = vld [vmem:[%s2 + $0xe8] sm:$0xff]
    %v1305 = vld [vmem:[%s2 + $0xf0] sm:$0xff]
    %v1306 = vld [vmem:[%s2 + $0xf8] sm:$0xff]
    %v1307 = vld [vmem:[%s2 + $0x100] sm:$0x1]
    %v1308 = vlaneseq
    %v1309 = vshrl.u32 %v1308, 7
    %v1310 = vsub.s32 0, %v1309
    %v1311 = vrot.slane %v1307, %v1310
    %vm1316 = vcmask 1041409
    %v1317 = vsel %vm1316, %v1268, %v1256
    %v1318 = vsel %vm1316, %v1274, %v1262
    %1321 = vmatprep.subr.mxu0 0.0
    %1322 = vmatpush1.msra.mxu0 %v1275
    %1323 = vmatprep.subr.mxu0 0.0
    %1324 = vmatpush1.msra.mxu0 %v1276
    %1325 = vmatprep.subr.mxu0 0.0
    %1326 = vmatpush1.msra.mxu0 %v1277
    %1327 = vmatprep.subr.mxu0 0.0
    %1328 = vmatpush1.msra.mxu0 %v1278
    %1329 = vmatprep.subr.mxu0 0.0
    %1330 = vmatpush1.msra.mxu0 %v1279
    %1331 = vmatprep.subr.mxu0 0.0
    %1332 = vmatpush1.msra.mxu0 %v1280
    %1333 = vmatprep.subr.mxu0 0.0
    %1334 = vmatpush1.msra.mxu0 %v1281
    %1335 = vmatprep.subr.mxu0 0.0
    %1336 = vmatpush1.msra.mxu0 %v1282
    %1337 = vmatprep.subr.mxu0 0.0
    %1338 = vmatpush1.msra.mxu0 %v1283
    %1339 = vmatprep.subr.mxu0 0.0
    %1340 = vmatpush1.msra.mxu0 %v1284
    %1341 = vmatprep.subr.mxu0 0.0
    %1342 = vmatpush1.msra.mxu0 %v1285
    %1343 = vmatprep.subr.mxu0 0.0
    %1344 = vmatpush1.msra.mxu0 %v1286
    %1345 = vmatprep.subr.mxu0 0.0
    %1346 = vmatpush1.msra.mxu0 %v1287
    %1347 = vmatprep.subr.mxu0 0.0
    %1348 = vmatpush1.msra.mxu0 %v1288
    %1349 = vmatprep.subr.mxu0 0.0
    %1350 = vmatpush1.msra.mxu0 %v1289
    %1351 = vmatprep.subr.mxu0 0.0
    %1352 = vmatpush1.msra.mxu0 %v1290
    %1353 = vmatprep.subr.mxu0 0.0
    %1354 = vmatpush1.msra.mxu0 %v1291
    %1355 = vmatprep.subr.mxu0 0.0
    %1356 = vmatpush1.msra.mxu0 %v1292
    %1357 = vmatprep.subr.mxu0 0.0
    %1358 = vmatpush1.msra.mxu0 %v1293
    %1359 = vmatprep.subr.mxu0 0.0
    %1360 = vmatpush1.msra.mxu0 %v1294
    %1361 = vmatprep.subr.mxu0 0.0
    %1362 = vmatpush1.msra.mxu0 %v1295
    %1363 = vmatprep.subr.mxu0 0.0
    %1364 = vmatpush1.msra.mxu0 %v1296
    %1365 = vmatprep.subr.mxu0 0.0
    %1366 = vmatpush1.msra.mxu0 %v1297
    %1367 = vmatprep.subr.mxu0 0.0
    %1368 = vmatpush1.msra.mxu0 %v1298
    %1369 = vmatprep.subr.mxu0 0.0
    %1370 = vmatpush1.msra.mxu0 %v1299
    %1371 = vmatprep.subr.mxu0 0.0
    %1372 = vmatpush1.msra.mxu0 %v1300
    %1373 = vmatprep.subr.mxu0 0.0
    %1374 = vmatpush1.msra.mxu0 %v1301
    %1375 = vmatprep.subr.mxu0 0.0
    %1376 = vmatpush1.msra.mxu0 %v1302
    %1377 = vmatprep.subr.mxu0 0.0
    %1378 = vmatpush1.msra.mxu0 %v1303
    %1379 = vmatprep.subr.mxu0 0.0
    %1380 = vmatpush1.msra.mxu0 %v1304
    %1381 = vmatprep.subr.mxu0 0.0
    %1382 = vmatpush1.msra.mxu0 %v1305
    %1383 = vmatprep.subr.mxu0 0.0
    %1384 = vmatpush1.msra.mxu0 %v1306
    %1385 = vmatprep.mubr.f32.mxu0 %v1318
    %1386 = vmatmul.mubr.f32.gmra.mrb[0].mxu0 %v1317
    %v1387 = vpop.f32.mrb[0].mxu0
    %v1388 = vadd.f32 %v1311, %v1387
    %v1389 = vpop.f32.mrb[0].mxu0
    %1390 = vdwg.mxu0
    %vm1391 = vcmask 123904
    %1392 = vst.msk [vmem:[#allocation2] sm:$0x3] %vm1391, %v1388
    // Predicated region
    $region14: #{_forward.1} parent=1 // pred_check
      _
    $region15: #{_forward.1} parent=1 // pred_check_branch
      %1394 = sbr.rel (0) target = $region17
    $region16: #{_forward.1} parent=1 // pred_region
      %s1396 = ssub.s32 32, 32
      %1397 = vsyncadd [#allocation3], %s1396
      %s1399 = sshll.u32 [#allocation2], 4
      %s1400 = int_to_ptr.vmem [resolvable:$true] %s1399
      %1402 = dma.vmem_to_hbm [thread:$0]  %s1400, 32, %s3, [#allocation3]
    $region17: #{_forward.1} parent=1 // pred_fallthru
      _
    // Predicated region
    $region18: #{_forward.1} parent=1 // pred_check
      _
    $region19: #{_forward.1} parent=1 // pred_check_branch
      %1404 = sbr.rel (0) target = $region21
    $region20: #{_forward.1} parent=1 // pred_region
      %1405 = dma.done [#allocation3], 32
    $region21: #{_forward.1} parent=1 // pred_fallthru
      _
    %1406 = vsyncpa [#allocation3], 1

</llo_original>
